<compile_context>
chip_gen: v7x
topology: tpu7x:2x2x1
jax: 0.10.0
libtpu: 0.0.40
codegen_flags: <defaults>
</compile_context>

<pallas_src>
import functools
import math

import jax
import jax.numpy as jnp
from jax.experimental import pallas as pl
from jax.experimental.pallas import tpu as pltpu


def _round_up(x, m):
    return ((x + m - 1) // m) * m


def _round_down(x, m):
    return (x // m) * m


def _cdiv(a, b):
    return (a + b - 1) // b


def _lora_kernel(x_ref, down_t_ref, up_t_ref, o_ref, *, scale, compute_dtype):
    # Cast input to the weight dtype (mirrors `hidden_states.to(dtype)`).
    x = x_ref[...].astype(compute_dtype)
    # (tm, in) @ (in, rank_p) -> (tm, rank_p); canonical [M,K]x[K,N] on the
    # MXU, f32 accumulation.  rank_p is lane-dense (multiple of 128).
    down_h = jnp.dot(x, down_t_ref[...], preferred_element_type=jnp.float32)
    # Cast back to the layer dtype (mirrors the PyTorch per-layer dtype),
    # then (tm, rank_p) @ (rank_p, out_p) -> (tm, out_p).
    up_h = jnp.dot(down_h.astype(compute_dtype), up_t_ref[...],
                   preferred_element_type=jnp.float32)
    # Scale in f32, then cast back to the original input dtype.
    o_ref[...] = (up_h * scale).astype(o_ref.dtype)


_INTERNAL_SCRATCH = 6 << 20  # allowance for Mosaic internal scratch


def _vmem_bytes(tm, in_f, out_p, rank_p, x_item, o_item, w_item):
    x_tiles = 2 * tm * in_f * x_item                          # dbl-buffered x tile
    o_tiles = 2 * tm * out_p * o_item                         # dbl-buffered out tile
    w_tiles = 2 * (in_f * rank_p + rank_p * out_p) * w_item   # grid-invariant weights
    inter = tm * rank_p * 4 + tm * out_p * 4                  # f32 matmul outputs
    casts = 0
    if w_item < 4:                                            # x / down_h dtype casts
        casts = tm * (in_f + rank_p) * w_item
    return x_tiles + o_tiles + w_tiles + inter + casts


def lora_linear_forward(hidden_states, down_w, up_w, network_alpha=None,
                        *, tm=512):
    """Pallas implementation of LoRALinearLayer.forward.

    hidden_states: [..., in_features] (any leading dims)
    down_w:        [rank, in_features]   (nn.Linear convention)
    up_w:          [out_features, rank]
    """
    orig_dtype = hidden_states.dtype
    compute_dtype = down_w.dtype
    rank, in_features = down_w.shape
    out_features = up_w.shape[0]

    lead_shape = hidden_states.shape[:-1]
    m = int(math.prod(lead_shape)) if lead_shape else 1
    x2d = hidden_states.reshape(m, in_features)

    scale = 1.0
    if network_alpha is not None:
        scale = float(network_alpha) / float(rank)

    # Lane-dense padded dims: rank and out_features rounded up to 128.
    rank_p = _round_up(max(rank, 1), 128)
    out_p = _round_up(out_features, 128)

    # One-time (tiny) wrapper-side transpose + zero-pad to canonical [K, N].
    down_t = jnp.pad(down_w.T.astype(compute_dtype),
                     ((0, 0), (0, rank_p - rank)))                # [in, rank_p]
    up_t = jnp.pad(up_w.T.astype(compute_dtype),
                   ((0, rank_p - rank), (0, out_p - out_features)))  # [rank_p, out_p]

    x_item = jnp.dtype(orig_dtype).itemsize
    o_item = x_item
    w_item = jnp.dtype(compute_dtype).itemsize

    # Row granularity: 16 when any 16-bit dtype packs 2 rows/sublane, else 8.
    g = 16 if min(x_item, w_item) <= 2 else 8

    # Generation-aware VMEM working cap.
    try:
        phys_vmem = int(pltpu.get_tpu_info().vmem_capacity_bytes)
    except Exception:
        phys_vmem = 64 << 20  # conservative fallback (v7x per-TensorCore)
    work_cap = (40 << 20) if phys_vmem <= (64 << 20) else (96 << 20)

    # Requested tile, clamped to the row count and to >=2 grid steps when M
    # allows (so the "parallel" grid axis can shard over 2 TensorCores).
    tm_eff = min(_round_up(tm, g), _round_up(m, g),
                 max(g, _round_up(_cdiv(m, 2), g)))

    # Largest g-multiple tile that fits the (correctly accounted) budget.
    fixed = _vmem_bytes(0, in_features, out_p, rank_p, x_item, o_item, w_item)
    per_row = _vmem_bytes(1, in_features, out_p, rank_p,
                          x_item, o_item, w_item) - fixed
    avail = work_cap - _INTERNAL_SCRATCH - fixed
    if per_row > 0 and avail > 0:
        tm_fit = _round_down(avail // per_row, g)
        if tm_fit >= g:
            tm_eff = min(tm_eff, tm_fit)
    tm_eff = max(tm_eff, g)
    # TODO(synk): if even tm_eff == g exceeds the budget (extremely wide
    # layers), a K-tiled accumulator variant would be needed.

    # Pad rows so the grid covers M exactly with full-tile stores.
    padded_m = _round_up(m, tm_eff)
    if padded_m != m:
        x2d = jnp.pad(x2d, ((0, padded_m - m), (0, 0)))

    work_bytes = _vmem_bytes(tm_eff, in_features, out_p, rank_p,
                             x_item, o_item, w_item) + _INTERNAL_SCRATCH
    # Never below the 32 MiB default, always leave >=8 MiB physical headroom.
    vmem_limit = min(max(work_bytes, 32 << 20), phys_vmem - (8 << 20))

    cost = pl.CostEstimate(
        flops=2 * m * rank * (in_features + out_features),
        transcendentals=0,
        bytes_accessed=(m * in_features * x_item
                        + m * out_features * o_item
                        + (rank * in_features + out_features * rank) * w_item))

    kernel = functools.partial(_lora_kernel, scale=scale,
                               compute_dtype=compute_dtype)

    out2d = pl.pallas_call(
        kernel,
        out_shape=jax.ShapeDtypeStruct((padded_m, out_p), orig_dtype),
        grid_spec=pltpu.PrefetchScalarGridSpec(
            num_scalar_prefetch=0,
            grid=(padded_m // tm_eff,),
            in_specs=[
                pl.BlockSpec((tm_eff, in_features), lambda i: (i, 0)),
                pl.BlockSpec((in_features, rank_p), lambda i: (0, 0)),
                pl.BlockSpec((rank_p, out_p), lambda i: (0, 0)),
            ],
            out_specs=pl.BlockSpec((tm_eff, out_p), lambda i: (i, 0)),
        ),
        compiler_params=pltpu.CompilerParams(
            dimension_semantics=("parallel",),
            vmem_limit_bytes=int(vmem_limit)),
        cost_estimate=cost,
    )(x2d, down_t, up_t)

    out2d = out2d[:m, :out_features]
    return out2d.reshape(*lead_shape, out_features)


if __name__ == "__main__":
    # Small shapes consistent with the module: batch=2, seq=8, hidden=32.
    batch, seq = 2, 8
    in_features, out_features, rank = 32, 32, 4
    network_alpha = 8.0

    key = jax.random.PRNGKey(0)
    kx, kd = jax.random.split(key)

    # Deterministic parameter init mirroring LoRALinearLayer.__init__:
    #   down.weight ~ Normal(0, 1/rank), up.weight = 0
    down_w = (jax.random.normal(kd, (rank, in_features), jnp.float32)
              * (1.0 / rank))
    up_w = jnp.zeros((out_features, rank), jnp.float32)

    hidden_states = jax.random.normal(kx, (batch, seq, in_features),
                                      jnp.float32)

    out = lora_linear_forward(hidden_states, down_w, up_w,
                              network_alpha=network_alpha)
    out = jax.block_until_ready(out)

    # Pure-JAX reference check of the forward semantics.
    ref = (hidden_states.astype(down_w.dtype) @ down_w.T) @ up_w.T
    ref = ref * (network_alpha / rank)
    ref = ref.astype(hidden_states.dtype)
    assert out.shape == (batch, seq, out_features)
    assert jnp.allclose(out, ref, atol=1e-5), "mismatch vs reference"

    # Nonzero `up` weights, ragged row count, and a non-128-multiple
    # out_features: exercises row padding, rank/out lane padding, and the
    # >=2-step parallel grid.
    seq2, out2_features = 13, 48
    hidden_states2 = jax.random.normal(jax.random.PRNGKey(2),
                                       (batch, seq2, in_features), jnp.float32)
    up_w2 = jax.random.normal(jax.random.PRNGKey(1),
                              (out2_features, rank), jnp.float32) * 0.1
    out2 = jax.block_until_ready(
        lora_linear_forward(hidden_states2, down_w, up_w2,
                            network_alpha=network_alpha))
    ref2 = ((hidden_states2 @ down_w.T) @ up_w2.T) * (network_alpha / rank)
    assert out2.shape == (batch, seq2, out2_features)
    assert jnp.allclose(out2, ref2, atol=1e-4), "mismatch vs reference (up!=0)"

    print("KERNEL_OK")
</pallas_src>

<mosaic_0001>
module attributes {stable_mosaic.version = 11 : i64} {
  func.func @_lora_kernel(%arg0: i32, %arg1: memref<8x32xf32, #tpu.memory_space<vmem>>, %arg2: memref<32x128xf32, #tpu.memory_space<vmem>>, %arg3: memref<128x128xf32, #tpu.memory_space<vmem>>, %arg4: memref<8x128xf32, #tpu.memory_space<vmem>>) attributes {dimension_semantics = [#tpu.dimension_semantics<parallel>], iteration_bounds = array<i64: 2>, scalar_prefetch = 0 : i64, scratch_operands = 0 : i64, tpu.core_type = #tpu.core_type<tc>, window_params = [{transform_indices = @transform_0, window_bounds = array<i64: 8, 32>}, {pipeline_mode = #tpu.pipeline_mode<synchronous>, transform_indices = @transform_1, window_bounds = array<i64: 32, 128>}, {pipeline_mode = #tpu.pipeline_mode<synchronous>, transform_indices = @transform_2, window_bounds = array<i64: 128, 128>}, {transform_indices = @transform_3, window_bounds = array<i64: 8, 128>}]} {
    %c0 = arith.constant 0 : index
    %c0_0 = arith.constant 0 : index
    %0 = vector.load %arg1[%c0, %c0_0] : memref<8x32xf32, #tpu.memory_space<vmem>>, vector<8x32xf32>
    %c0_1 = arith.constant 0 : index
    %c0_2 = arith.constant 0 : index
    %1 = vector.load %arg2[%c0_1, %c0_2] : memref<32x128xf32, #tpu.memory_space<vmem>>, vector<32x128xf32>
    %cst = arith.constant dense<0.000000e+00> : vector<8x128xf32>
    %2 = tpu.matmul %0, %1, %cst {dimension_numbers = #tpu.dot_dimension_numbers<[1], [0], [0], [1], [0, 0, 1, 1], [], []>} : vector<8x32xf32>, vector<32x128xf32>, vector<8x128xf32> -> vector<8x128xf32>
    %c0_3 = arith.constant 0 : index
    %c0_4 = arith.constant 0 : index
    %3 = vector.load %arg3[%c0_3, %c0_4] : memref<128x128xf32, #tpu.memory_space<vmem>>, vector<128x128xf32>
    %cst_5 = arith.constant dense<0.000000e+00> : vector<8x128xf32>
    %4 = tpu.matmul %2, %3, %cst_5 {dimension_numbers = #tpu.dot_dimension_numbers<[1], [0], [0], [1], [0, 0, 1, 1], [], []>} : vector<8x128xf32>, vector<128x128xf32>, vector<8x128xf32> -> vector<8x128xf32>
    %cst_6 = arith.constant 2.000000e+00 : f32
    %5 = vector.broadcast %cst_6 : f32 to vector<8x128xf32>
    %6 = arith.mulf %4, %5 : vector<8x128xf32>
    %c0_7 = arith.constant 0 : index
    %c0_8 = arith.constant 0 : index
    %7 = vector.load %arg4[%c0_7, %c0_8] : memref<8x128xf32, #tpu.memory_space<vmem>>, vector<8x128xf32>
    tpu.vector_store %arg4[%c0_7, %c0_8], %6 {strides = array<i32>} : memref<8x128xf32, #tpu.memory_space<vmem>>, vector<8x128xf32>,
    return
  }
  func.func @transform_0(%arg0: i32) -> (i32, i32) {
    %c0_i32 = arith.constant 0 : i32
    %c0_i32_0 = arith.constant 0 : i32
    return %arg0, %c0_i32 : i32, i32
  }
  func.func @transform_1(%arg0: i32) -> (i32, i32) {
    %c0_i32 = arith.constant 0 : i32
    %c0_i32_0 = arith.constant 0 : i32
    %c0_i32_1 = arith.constant 0 : i32
    return %c0_i32, %c0_i32_0 : i32, i32
  }
  func.func @transform_2(%arg0: i32) -> (i32, i32) {
    %c0_i32 = arith.constant 0 : i32
    %c0_i32_0 = arith.constant 0 : i32
    %c0_i32_1 = arith.constant 0 : i32
    return %c0_i32, %c0_i32_0 : i32, i32
  }
  func.func @transform_3(%arg0: i32) -> (i32, i32) {
    %c0_i32 = arith.constant 0 : i32
    %c0_i32_0 = arith.constant 0 : i32
    return %arg0, %c0_i32 : i32, i32
  }
}

</mosaic_0001>

<llo_original>
// kernel: tpu_custom_call.1
$region0: #{tpu_custom_call.1}
  #allocation0 [shape = 'u32[]', space=smem, size = 0x4, offset = 0x4, fixed_abs, tag = 'smem constant byte address 0x4 - core index']
  #allocation1 [shape = 'u32[144,128]{1,0:T(1,128)}', space=vmem, size = 0x12000, scoped, tag = 'internal scratch']
  %s0 = inlined_call_operand.hbm [shape: f32[16,32], index: 0, kind: input, shape index: {}]
  %s1 = inlined_call_operand.hbm [shape: f32[32,128], index: 1, kind: input, shape index: {}]
  %s2 = inlined_call_operand.hbm [shape: f32[128,128], index: 2, kind: input, shape index: {}]
  %s3 = inlined_call_operand.hbm [shape: f32[16,128], index: 3, kind: output, shape index: {}]
  %s4 = sld [smem:[#allocation0]]
  $region57: #{tpu_custom_call.1} parent=0
    _
  %s6 = ssub.s32 1, %s4
  %s7 = scalar_select 0, %s6, %s4
  $region1: #{tpu_custom_call.1} parent=0
    #allocation2 [shape = 'u8[8192]{0}', space=vmem, size = 0x2000, scoped, tag = 'input window, operand 0']
    #allocation3 [shape = 's32[2]{0}', space=sflag, size = 0x8, scoped, tag = 'scoped memory for tpu_custom_call.1']
    #allocation4 [shape = 's32[2]{0}', space=sflag, size = 0x8, scoped, tag = 'scoped memory for tpu_custom_call.1']
    #allocation5 [shape = 'u8[16384]{0}', space=vmem, size = 0x4000, scoped, tag = 'input window, operand 1, single buffered']
    #allocation6 [shape = 's32[1]{0}', space=sflag, size = 0x4, scoped, tag = 'scoped memory for tpu_custom_call.1']
    #allocation7 [shape = 'u8[65536]{0}', space=vmem, size = 0x10000, scoped, tag = 'input window, operand 2, single buffered']
    #allocation8 [shape = 'u8[8192]{0}', space=vmem, size = 0x2000, scoped, tag = 'output window, operand 0']
    %8 = vsyncpa [#allocation3], 0
    %s9 = scalar_lea.sflag [#allocation3], 1
    %10 = vsyncpa %s9, 0
    %11 = vsyncpa [#allocation6], 0
    %12 = vsyncpa [#allocation4], 0
    %s13 = scalar_lea.sflag [#allocation4], 1
    %14 = vsyncpa %s13, 0
    loop: start=0, step=1, limit=4
    $region2: #{tpu_custom_call.1} parent=1 // loop_pre_header
      _
    $region3: #{tpu_custom_call.1} parent=1 // loop_header
      %s16 = sphi 0, %s20
      %p17 = scmp.ge.s32.totalorder %s16, 4
      %s26 = sphi 0, %s28
      %s29 = sphi 0, %s26
      %s30 = sphi 0, %s29
      %s46 = sphi 0, %s30
      %s50 = sphi 0, %s50
      %s52 = sphi 0, %s50
      %s53 = sphi 0, %s52
      %s67 = sphi 0, %s53
      %s71 = sphi 0, %s71
      %s73 = sphi 0, %s71
      %s74 = sphi 0, %s73
      %s88 = sphi 0, %s74
      %s94 = sphi 0, %s96
      %s97 = sphi 0, %s94
      %s98 = sphi 0, %s97
      %s114 = sphi 0, %s98
    $region4: #{tpu_custom_call.1} parent=1 // loop_header_branch
      %19 = sbr.rel (%p17) target = $region8
    $region5: #{tpu_custom_call.1} parent=1 // loop_body
      %s21 = ssub.s32 %s16, 1
      %s22 = ssub.s32 %s16, 2
      %s23 = sadd.s32 %s16, 1
      %s24 = ssub.s32 %s16, %s23
      %p25 = scmp.eq.s32.totalorder %s24, 0
      %s27 = sadd.s32 %s26, 1
      %s28 = scalar_select %p25, %s26, %s27
      %p31 = pneg %p25
      %p32 = scmp.eq.s32.totalorder %s16, 1
      %p33 = por %p31, %p32
      %p34 = scmp.ne.s32.totalorder %s26, %s29
      %p35 = scmp.eq.s32.totalorder %s16, 0
      %p36 = por %p34, %p35
      %p37 = scmp.ne.s32.totalorder %s26, %s29
      %p38 = scmp.eq.s32.totalorder %s21, 1
      %p39 = por %p37, %p38
      %p40 = scmp.ne.s32.totalorder %s29, %s30
      %p41 = scmp.eq.s32.totalorder %s21, 0
      %p42 = por %p40, %p41
      %p43 = scmp.ne.s32.totalorder %s29, %s30
      %p44 = scmp.eq.s32.totalorder %s22, 1
      %p45 = por %p43, %p44
      %p47 = scmp.ne.s32.totalorder %s30, %s46
      %p48 = scmp.eq.s32.totalorder %s22, 0
      %p49 = por %p47, %p48
      %s51 = sadd.s32 %s50, 1
      %p54 = scmp.eq.s32.totalorder %s16, 1
      %p55 = scmp.ne.s32.totalorder %s50, %s52
      %p56 = scmp.eq.s32.totalorder %s16, 0
      %p57 = por %p55, %p56
      %p58 = scmp.ne.s32.totalorder %s50, %s52
      %p59 = scmp.eq.s32.totalorder %s21, 1
      %p60 = por %p58, %p59
      %p61 = scmp.ne.s32.totalorder %s52, %s53
      %p62 = scmp.eq.s32.totalorder %s21, 0
      %p63 = por %p61, %p62
      %p64 = scmp.ne.s32.totalorder %s52, %s53
      %p65 = scmp.eq.s32.totalorder %s22, 1
      %p66 = por %p64, %p65
      %p68 = scmp.ne.s32.totalorder %s53, %s67
      %p69 = scmp.eq.s32.totalorder %s22, 0
      %p70 = por %p68, %p69
      %s72 = sadd.s32 %s71, 1
      %p75 = scmp.eq.s32.totalorder %s16, 1
      %p76 = scmp.ne.s32.totalorder %s71, %s73
      %p77 = scmp.eq.s32.totalorder %s16, 0
      %p78 = por %p76, %p77
      %p79 = scmp.ne.s32.totalorder %s71, %s73
      %p80 = scmp.eq.s32.totalorder %s21, 1
      %p81 = por %p79, %p80
      %p82 = scmp.ne.s32.totalorder %s73, %s74
      %p83 = scmp.eq.s32.totalorder %s21, 0
      %p84 = por %p82, %p83
      %p85 = scmp.ne.s32.totalorder %s73, %s74
      %p86 = scmp.eq.s32.totalorder %s22, 1
      %p87 = por %p85, %p86
      %p89 = scmp.ne.s32.totalorder %s74, %s88
      %p90 = scmp.eq.s32.totalorder %s22, 0
      %p91 = por %p89, %p90
      %s92 = ssub.s32 %s16, %s23
      %p93 = scmp.eq.s32.totalorder %s92, 0
      %s95 = sadd.s32 %s94, 1
      %s96 = scalar_select %p93, %s94, %s95
      %p99 = pneg %p93
      %p100 = scmp.eq.s32.totalorder %s16, 1
      %p101 = por %p99, %p100
      %p102 = scmp.ne.s32.totalorder %s94, %s97
      %p103 = scmp.eq.s32.totalorder %s16, 0
      %p104 = por %p102, %p103
      %p105 = scmp.ne.s32.totalorder %s94, %s97
      %p106 = scmp.eq.s32.totalorder %s21, 1
      %p107 = por %p105, %p106
      %p108 = scmp.ne.s32.totalorder %s97, %s98
      %p109 = scmp.eq.s32.totalorder %s21, 0
      %p110 = por %p108, %p109
      %p111 = scmp.ne.s32.totalorder %s97, %s98
      %p112 = scmp.eq.s32.totalorder %s22, 1
      %p113 = por %p111, %p112
      %p115 = scmp.ne.s32.totalorder %s98, %s114
      %p116 = scmp.eq.s32.totalorder %s22, 0
      %p117 = por %p115, %p116
      %p118 = scmp.le.s32.totalorder 1, %s16
      %p119 = scmp.lt.s32.totalorder %s16, 3
      %p120 = pnand %p118, %p119
      %p121 = pneg %p120
      // Predicated region
      $region9: #{tpu_custom_call.1} parent=5 // pred_check
        _
      $region10: #{tpu_custom_call.1} parent=5 // pred_check_branch
        %123 = sbr.rel (%p120) target = $region12
      $region11: #{tpu_custom_call.1} parent=5 // pred_region
        %s124 = ssub.s32 %s16, 1
        // Predicated region
        $region13: #{tpu_custom_call.1} parent=11 // pred_check
          %p125 = pneg %p63
        $region14: #{tpu_custom_call.1} parent=11 // pred_check_branch
          %127 = sbr.rel (%p125) target = $region16
        $region15: #{tpu_custom_call.1} parent=11 // pred_region
          %s129 = ssub.s32 512, 512
          %130 = vsyncadd [#allocation6], %s129
          %s131 = sshll.u32 [#allocation5], 4
          %s132 = int_to_ptr.vmem [resolvable:$true] %s131
          %137 = dma.hbm_to_vmem [thread:$0]  %s1, 512, %s132, [#allocation6], 128, 128, 8
        $region16: #{tpu_custom_call.1} parent=11 // pred_fallthru
          _
        // Predicated region
        $region17: #{tpu_custom_call.1} parent=11 // pred_check
          %p138 = pneg %p84
        $region18: #{tpu_custom_call.1} parent=11 // pred_check_branch
          %140 = sbr.rel (%p138) target = $region20
        $region19: #{tpu_custom_call.1} parent=11 // pred_region
          %s142 = ssub.s32 2048, 2048
          %143 = vsyncadd [#allocation6], %s142
          %s144 = sshll.u32 [#allocation7], 4
          %s145 = int_to_ptr.vmem [resolvable:$true] %s144
          %150 = dma.hbm_to_vmem [thread:$0]  %s2, 2048, %s145, [#allocation6], 128, 128, 8
        $region20: #{tpu_custom_call.1} parent=11 // pred_fallthru
          _
      $region12: #{tpu_custom_call.1} parent=5 // pred_fallthru
        _
      %p151 = scmp.lt.s32.totalorder %s16, 2
      // Predicated region
      $region21: #{tpu_custom_call.1} parent=5 // pred_check
        %p152 = pneg %p151
      $region22: #{tpu_custom_call.1} parent=5 // pred_check_branch
        %154 = sbr.rel (%p152) target = $region24
      $region23: #{tpu_custom_call.1} parent=5 // pred_region
        // Predicated region
        $region25: #{tpu_custom_call.1} parent=23 // pred_check
          %p155 = pneg %p36
        $region26: #{tpu_custom_call.1} parent=23 // pred_check_branch
          %157 = sbr.rel (%p155) target = $region28
        $region27: #{tpu_custom_call.1} parent=23 // pred_region
          %s158 = sand.u32 %s26, 1
          %s159 = scalar_lea.sflag [#allocation3], %s158
          %s160 = sand.u32 %s26, 1
          %s161 = smul.addr %s160, 8
          %s162 = scalar_lea.vmem [#allocation2], %s161
          %s164 = ssub.s32 128, 128
          %165 = vsyncadd %s159, %s164
          %s166 = smul.addr %s16, 128
          %s167 = scalar_lea.hbm %s0, %s166
          %s169 = sshll.u32 %s162, 4
          %s170 = int_to_ptr.vmem [resolvable:$true] %s169
          %172 = dma.hbm_to_vmem [thread:$0]  %s167, 128, %s170, %s159
        $region28: #{tpu_custom_call.1} parent=23 // pred_fallthru
          _
      $region24: #{tpu_custom_call.1} parent=5 // pred_fallthru
        _
      %p173 = scmp.le.s32.totalorder 1, %s16
      %p174 = scmp.lt.s32.totalorder %s16, 3
      %p175 = pnand %p173, %p174
      %p176 = pneg %p175
      // Predicated region
      $region29: #{tpu_custom_call.1} parent=5 // pred_check
        _
      $region30: #{tpu_custom_call.1} parent=5 // pred_check_branch
        %178 = sbr.rel (%p175) target = $region32
      $region31: #{tpu_custom_call.1} parent=5 // pred_region
        %s179 = ssub.s32 %s16, 1
        %s180 = sand.u32 %s29, 1
        %s181 = scalar_lea.sflag [#allocation3], %s180
        %s182 = sand.u32 %s29, 1
        %s183 = smul.addr %s182, 8
        %s184 = scalar_lea.vmem [#allocation2], %s183
        // Predicated region
        $region33: #{tpu_custom_call.1} parent=31 // pred_check
          %p185 = pneg %p42
        $region34: #{tpu_custom_call.1} parent=31 // pred_check_branch
          %187 = sbr.rel (%p185) target = $region36
        $region35: #{tpu_custom_call.1} parent=31 // pred_region
          %188 = dma.done %s181, 128
        $region36: #{tpu_custom_call.1} parent=31 // pred_fallthru
          _
        // Predicated region
        $region37: #{tpu_custom_call.1} parent=31 // pred_check
          %p189 = pneg %p63
        $region38: #{tpu_custom_call.1} parent=31 // pred_check_branch
          %191 = sbr.rel (%p189) target = $region40
        $region39: #{tpu_custom_call.1} parent=31 // pred_region
          %192 = dma.done [#allocation6], 512
        $region40: #{tpu_custom_call.1} parent=31 // pred_fallthru
          _
        // Predicated region
        $region41: #{tpu_custom_call.1} parent=31 // pred_check
          %p193 = pneg %p84
        $region42: #{tpu_custom_call.1} parent=31 // pred_check_branch
          %195 = sbr.rel (%p193) target = $region44
        $region43: #{tpu_custom_call.1} parent=31 // pred_region
          %196 = dma.done [#allocation6], 2048
        $region44: #{tpu_custom_call.1} parent=31 // pred_fallthru
          _
        %s197 = sand.u32 %s29, 1
        %s198 = scalar_lea.sflag [#allocation3], %s197
        %s199 = sand.u32 %s29, 1
        %s200 = smul.addr %s199, 8
        %s201 = scalar_lea.vmem [#allocation2], %s200
        %p202 = pneg %p42
        %p203 = pneg %p39
        %p204 = pneg %p63
        %p205 = pneg %p60
        %p206 = pneg %p84
        %p207 = pneg %p81
        %p208 = pneg %p110
        %p209 = pneg %p107
        %s210 = sand.u32 %s97, 1
        %s211 = scalar_lea.sflag [#allocation4], %s210
        %s212 = sand.u32 %s97, 1
        %s213 = smul.addr %s212, 8
        %s214 = scalar_lea.vmem [#allocation8], %s213
        %v215 = vld [vmem:[%s184] sm:$0xff]
        %v216 = vld [vmem:[#allocation5] sm:$0xff]
        %v217 = vld [vmem:[#allocation5 + $0x8] sm:$0xff]
        %v218 = vld [vmem:[#allocation5 + $0x10] sm:$0xff]
        %v219 = vld [vmem:[#allocation5 + $0x18] sm:$0xff]
        %vm220 = vcmask 261120
        %v222 = vsel %vm220, %v215, 0
        %224 = vmatprep.subr.mxu0 0.0
        %225 = vmatpush1.msra.mxu0 %v216
        %226 = vmatprep.subr.mxu0 0.0
        %227 = vmatpush1.msra.mxu0 %v217
        %228 = vmatprep.subr.mxu0 0.0
        %229 = vmatpush1.msra.mxu0 %v218
        %230 = vmatprep.subr.mxu0 0.0
        %231 = vmatpush1.msra.mxu0 %v219
        %232 = vmatprep.subr.mxu0 0.0
        %233 = vmatpush1.msra.mxu0 0.0
        %234 = vmatprep.subr.mxu0 0.0
        %235 = vmatpush1.msra.mxu0 0.0
        %236 = vmatprep.subr.mxu0 0.0
        %237 = vmatpush1.msra.mxu0 0.0
        %238 = vmatprep.subr.mxu0 0.0
        %239 = vmatpush1.msra.mxu0 0.0
        %240 = vmatprep.subr.mxu0 0.0
        %241 = vmatpush1.msra.mxu0 0.0
        %242 = vmatprep.subr.mxu0 0.0
        %243 = vmatpush1.msra.mxu0 0.0
        %244 = vmatprep.subr.mxu0 0.0
        %245 = vmatpush1.msra.mxu0 0.0
        %246 = vmatprep.subr.mxu0 0.0
        %247 = vmatpush1.msra.mxu0 0.0
        %248 = vmatprep.subr.mxu0 0.0
        %249 = vmatpush1.msra.mxu0 0.0
        %250 = vmatprep.subr.mxu0 0.0
        %251 = vmatpush1.msra.mxu0 0.0
        %252 = vmatprep.subr.mxu0 0.0
        %253 = vmatpush1.msra.mxu0 0.0
        %254 = vmatprep.subr.mxu0 0.0
        %255 = vmatpush1.msra.mxu0 0.0
        %256 = vmatprep.subr.mxu0 0.0
        %257 = vmatpush1.msra.mxu0 0.0
        %258 = vmatprep.subr.mxu0 0.0
        %259 = vmatpush1.msra.mxu0 0.0
        %260 = vmatprep.subr.mxu0 0.0
        %261 = vmatpush1.msra.mxu0 0.0
        %262 = vmatprep.subr.mxu0 0.0
        %263 = vmatpush1.msra.mxu0 0.0
        %264 = vmatprep.subr.mxu0 0.0
        %265 = vmatpush1.msra.mxu0 0.0
        %266 = vmatprep.subr.mxu0 0.0
        %267 = vmatpush1.msra.mxu0 0.0
        %268 = vmatprep.subr.mxu0 0.0
        %269 = vmatpush1.msra.mxu0 0.0
        %270 = vmatprep.subr.mxu0 0.0
        %271 = vmatpush1.msra.mxu0 0.0
        %272 = vmatprep.subr.mxu0 0.0
        %273 = vmatpush1.msra.mxu0 0.0
        %274 = vmatprep.subr.mxu0 0.0
        %275 = vmatpush1.msra.mxu0 0.0
        %276 = vmatprep.subr.mxu0 0.0
        %277 = vmatpush1.msra.mxu0 0.0
        %278 = vmatprep.subr.mxu0 0.0
        %279 = vmatpush1.msra.mxu0 0.0
        %280 = vmatprep.subr.mxu0 0.0
        %281 = vmatpush1.msra.mxu0 0.0
        %282 = vmatprep.subr.mxu0 0.0
        %283 = vmatpush1.msra.mxu0 0.0
        %284 = vmatprep.subr.mxu0 0.0
        %285 = vmatpush1.msra.mxu0 0.0
        %286 = vmatprep.subr.mxu0 0.0
        %287 = vmatpush1.msra.mxu0 0.0
        %288 = vmatprep.mubr.f32.mxu0 0.0
        %289 = vmatmul.mubr.f32.gmra.mrb[0].mxu0 %v222
        %v290 = vpop.f32.mrb[0].mxu0
        %v291 = vadd.f32 0.0, %v290
        %v292 = vpop.f32.mrb[0].mxu0
        %293 = vdwg.mxu0
        %v294 = vld [vmem:[#allocation7] sm:$0xff]
        %v295 = vld [vmem:[#allocation7 + $0x8] sm:$0xff]
        %v296 = vld [vmem:[#allocation7 + $0x10] sm:$0xff]
        %v297 = vld [vmem:[#allocation7 + $0x18] sm:$0xff]
        %v298 = vld [vmem:[#allocation7 + $0x20] sm:$0xff]
        %v299 = vld [vmem:[#allocation7 + $0x28] sm:$0xff]
        %v300 = vld [vmem:[#allocation7 + $0x30] sm:$0xff]
        %v301 = vld [vmem:[#allocation7 + $0x38] sm:$0xff]
        %v302 = vld [vmem:[#allocation7 + $0x40] sm:$0xff]
        %v303 = vld [vmem:[#allocation7 + $0x48] sm:$0xff]
        %v304 = vld [vmem:[#allocation7 + $0x50] sm:$0xff]
        %v305 = vld [vmem:[#allocation7 + $0x58] sm:$0xff]
        %v306 = vld [vmem:[#allocation7 + $0x60] sm:$0xff]
        %v307 = vld [vmem:[#allocation7 + $0x68] sm:$0xff]
        %v308 = vld [vmem:[#allocation7 + $0x70] sm:$0xff]
        %v309 = vld [vmem:[#allocation7 + $0x78] sm:$0xff]
        %310 = vmatprep.subr.mxu0 0.0
        %311 = vmatpush1.msra.mxu0 %v294
        %312 = vmatprep.subr.mxu0 0.0
        %313 = vmatpush1.msra.mxu0 %v295
        %314 = vmatprep.subr.mxu0 0.0
        %315 = vmatpush1.msra.mxu0 %v296
        %316 = vmatprep.subr.mxu0 0.0
        %317 = vmatpush1.msra.mxu0 %v297
        %318 = vmatprep.subr.mxu0 0.0
        %319 = vmatpush1.msra.mxu0 %v298
        %320 = vmatprep.subr.mxu0 0.0
        %321 = vmatpush1.msra.mxu0 %v299
        %322 = vmatprep.subr.mxu0 0.0
        %323 = vmatpush1.msra.mxu0 %v300
        %324 = vmatprep.subr.mxu0 0.0
        %325 = vmatpush1.msra.mxu0 %v301
        %326 = vmatprep.subr.mxu0 0.0
        %327 = vmatpush1.msra.mxu0 %v302
        %328 = vmatprep.subr.mxu0 0.0
        %329 = vmatpush1.msra.mxu0 %v303
        %330 = vmatprep.subr.mxu0 0.0
        %331 = vmatpush1.msra.mxu0 %v304
        %332 = vmatprep.subr.mxu0 0.0
        %333 = vmatpush1.msra.mxu0 %v305
        %334 = vmatprep.subr.mxu0 0.0
        %335 = vmatpush1.msra.mxu0 %v306
        %336 = vmatprep.subr.mxu0 0.0
        %337 = vmatpush1.msra.mxu0 %v307
        %338 = vmatprep.subr.mxu0 0.0
        %339 = vmatpush1.msra.mxu0 %v308
        %340 = vmatprep.subr.mxu0 0.0
        %341 = vmatpush1.msra.mxu0 %v309
        %342 = vmatprep.subr.mxu0 0.0
        %343 = vmatpush1.msra.mxu0 0.0
        %344 = vmatprep.subr.mxu0 0.0
        %345 = vmatpush1.msra.mxu0 0.0
        %346 = vmatprep.subr.mxu0 0.0
        %347 = vmatpush1.msra.mxu0 0.0
        %348 = vmatprep.subr.mxu0 0.0
        %349 = vmatpush1.msra.mxu0 0.0
        %350 = vmatprep.subr.mxu0 0.0
        %351 = vmatpush1.msra.mxu0 0.0
        %352 = vmatprep.subr.mxu0 0.0
        %353 = vmatpush1.msra.mxu0 0.0
        %354 = vmatprep.subr.mxu0 0.0
        %355 = vmatpush1.msra.mxu0 0.0
        %356 = vmatprep.subr.mxu0 0.0
        %357 = vmatpush1.msra.mxu0 0.0
        %358 = vmatprep.subr.mxu0 0.0
        %359 = vmatpush1.msra.mxu0 0.0
        %360 = vmatprep.subr.mxu0 0.0
        %361 = vmatpush1.msra.mxu0 0.0
        %362 = vmatprep.subr.mxu0 0.0
        %363 = vmatpush1.msra.mxu0 0.0
        %364 = vmatprep.subr.mxu0 0.0
        %365 = vmatpush1.msra.mxu0 0.0
        %366 = vmatprep.subr.mxu0 0.0
        %367 = vmatpush1.msra.mxu0 0.0
        %368 = vmatprep.subr.mxu0 0.0
        %369 = vmatpush1.msra.mxu0 0.0
        %370 = vmatprep.subr.mxu0 0.0
        %371 = vmatpush1.msra.mxu0 0.0
        %372 = vmatprep.subr.mxu0 0.0
        %373 = vmatpush1.msra.mxu0 0.0
        %374 = vmatprep.mubr.f32.mxu0 0.0
        %375 = vmatmul.mubr.f32.gmra.mrb[0].mxu0 %v291
        %v376 = vpop.f32.mrb[0].mxu0
        %v377 = vadd.f32 0.0, %v376
        %v378 = vpop.f32.mrb[0].mxu0
        %379 = vdwg.mxu0
        %v380 = vmul.f32 %v377, 2.0
        %381 = vst [vmem:[%s214] sm:$0xff] %v380
        %s382 = sand.u32 %s97, 1
        %s383 = scalar_lea.sflag [#allocation4], %s382
        %s384 = sand.u32 %s97, 1
        %s385 = smul.addr %s384, 8
        %s386 = scalar_lea.vmem [#allocation8], %s385
        // Predicated region
        $region45: #{tpu_custom_call.1} parent=31 // pred_check
          %p387 = pneg %p107
        $region46: #{tpu_custom_call.1} parent=31 // pred_check_branch
          %389 = sbr.rel (%p387) target = $region48
        $region47: #{tpu_custom_call.1} parent=31 // pred_region
          %s391 = ssub.s32 128, 128
          %392 = vsyncadd %s383, %s391
          %s393 = smul.addr %s21, 128
          %s394 = scalar_lea.hbm %s3, %s393
          %s396 = sshll.u32 %s386, 4
          %s397 = int_to_ptr.vmem [resolvable:$true] %s396
          %399 = dma.vmem_to_hbm [thread:$0]  %s397, 128, %s394, %s383
        $region48: #{tpu_custom_call.1} parent=31 // pred_fallthru
          _
      $region32: #{tpu_custom_call.1} parent=5 // pred_fallthru
        _
      %p400 = scmp.le.s32.totalorder 2, %s16
      // Predicated region
      $region49: #{tpu_custom_call.1} parent=5 // pred_check
        %p401 = pneg %p400
      $region50: #{tpu_custom_call.1} parent=5 // pred_check_branch
        %403 = sbr.rel (%p401) target = $region52
      $region51: #{tpu_custom_call.1} parent=5 // pred_region
        %s404 = ssub.s32 %s16, 2
        // Predicated region
        $region53: #{tpu_custom_call.1} parent=51 // pred_check
          %p405 = pneg %p113
        $region54: #{tpu_custom_call.1} parent=51 // pred_check_branch
          %407 = sbr.rel (%p405) target = $region56
        $region55: #{tpu_custom_call.1} parent=51 // pred_region
          %s408 = sand.u32 %s98, 1
          %s409 = scalar_lea.sflag [#allocation4], %s408
          %s410 = sand.u32 %s98, 1
          %s411 = smul.addr %s410, 8
          %s412 = scalar_lea.vmem [#allocation8], %s411
          %413 = dma.done %s409, 128
        $region56: #{tpu_custom_call.1} parent=51 // pred_fallthru
          _
      $region52: #{tpu_custom_call.1} parent=5 // pred_fallthru
        _
    $region6: #{tpu_custom_call.1} parent=1 // loop_footer
      %s20 = sadd.s32 1, %s16
    $region7: #{tpu_custom_call.1} parent=1 // loop_footer_branch
      %15 = sbr.rel target = $region3
    $region8: #{tpu_custom_call.1} parent=1 // loop_exit
      _
    %414 = vsyncpa [#allocation3], 1
    %s415 = scalar_lea.sflag [#allocation3], 1
    %416 = vsyncpa %s415, 1
    %417 = vsyncpa [#allocation6], 1
    %418 = vsyncpa [#allocation4], 1
    %s419 = scalar_lea.sflag [#allocation4], 1
    %420 = vsyncpa %s419, 1

</llo_original>
